<compile_context>
chip_gen: v7x
topology: tpu7x:2x2x1
jax: 0.10.0
libtpu: 0.0.40
codegen_flags: <defaults>
</compile_context>

<pallas_src>
import jax
import jax.numpy as jnp
import numpy as np
from jax import lax
from jax.experimental import pallas as pl
from jax.experimental.pallas import tpu as pltpu


def _round_up(x, m):
    return (x + m - 1) // m * m


def _vmem_capacity_bytes():
    try:
        info = pltpu.get_tpu_info()
        cap = getattr(info, "vmem_capacity_bytes", None)
        if cap:
            return int(cap)
    except Exception:
        pass
    return 64 * 1024 * 1024  # safe lower bound (v7x physical VMEM per core)


def _pad2(x, rows, cols):
    pr, pc = rows - x.shape[0], cols - x.shape[1]
    if pr == 0 and pc == 0:
        return x
    return jnp.pad(x, ((0, pr), (0, pc)))


def _project_w(w):
    """relu + row-normalize; the divide goes to the EUP via approx reciprocal."""
    w = jnp.maximum(w, 0.0)
    inv = pl.reciprocal(jnp.sum(w, axis=-1, keepdims=True) + 1e-8, approx=True)
    return w * inv


def _row_scale(sumsq, delta):
    """clamp(delta/sqrt(sumsq), max=1) on the EUP.  All-zero rows (padding) map
    to scale=1 so padded rows stay inert even for delta == 0 (the torch
    reference would produce NaN for a genuine zero row with delta == 0)."""
    return jnp.where(sumsq > 0.0,
                     jnp.minimum(delta * lax.rsqrt(sumsq), 1.0),
                     jnp.ones_like(sumsq))


# ---------------------------------------------------------------------------
# Path A: small batch.  Single grid point, everything resident in VMEM,
# reassociated so D is never materialized:
#   x_hat = ((z @ W') @ C + z @ Relax') * exp(m)
# ---------------------------------------------------------------------------
def _small_call(z_bf, W_p, C_bf, R_p, exp_mult, delta, out_dtype, vmem_limit):
    delta = float(delta)
    batch_p = z_bf.shape[0]
    in_p = C_bf.shape[1]

    def kernel(z_ref, w_ref, c_ref, r_ref, e_ref, out_ref):
        w = _project_w(w_ref[...]).astype(jnp.bfloat16)
        r = r_ref[...]
        sumsq = jnp.sum(r * r, axis=-1, keepdims=True)
        relax = (r * _row_scale(sumsq, delta)).astype(jnp.bfloat16)

        z_b = z_ref[...]
        zw = jnp.dot(z_b, w, preferred_element_type=jnp.float32)
        y = jnp.dot(zw.astype(jnp.bfloat16), c_ref[...],
                    preferred_element_type=jnp.float32)
        y = y + jnp.dot(z_b, relax, preferred_element_type=jnp.float32)
        out_ref[...] = (y * e_ref[0]).astype(out_ref.dtype)

    return pl.pallas_call(
        kernel,
        out_shape=jax.ShapeDtypeStruct((batch_p, in_p), out_dtype),
        in_specs=[
            pl.BlockSpec(memory_space=pltpu.MemorySpace.VMEM),   # z (bf16)
            pl.BlockSpec(memory_space=pltpu.MemorySpace.VMEM),   # W (f32)
            pl.BlockSpec(memory_space=pltpu.MemorySpace.VMEM),   # C (bf16)
            pl.BlockSpec(memory_space=pltpu.MemorySpace.VMEM),   # Relax (f32)
            pl.BlockSpec(memory_space=pltpu.MemorySpace.SMEM),   # exp(multiplier)
        ],
        out_specs=pl.BlockSpec(memory_space=pltpu.MemorySpace.VMEM),
        compiler_params=pltpu.CompilerParams(vmem_limit_bytes=vmem_limit),
    )(z_bf, W_p, C_bf, R_p, exp_mult)


# ---------------------------------------------------------------------------
# Path B, stage 1: per-row L2 clamp factor for Relax (tiled reduction over in_dim).
# ---------------------------------------------------------------------------
def _relax_scale_call(R_p, delta, tn, vmem_limit):
    delta = float(delta)
    conc_p, in_p = R_p.shape
    grid = (in_p // tn,)

    def kernel(r_ref, scale_ref, acc_ref):
        @pl.when(pl.program_id(0) == 0)
        def _():
            acc_ref[...] = jnp.zeros_like(acc_ref)

        r = r_ref[...]
        acc_ref[...] += jnp.sum(r * r, axis=-1, keepdims=True)

        @pl.when(pl.program_id(0) == pl.num_programs(0) - 1)
        def _():
            scale_ref[...] = _row_scale(acc_ref[...], delta)

    return pl.pallas_call(
        kernel,
        out_shape=jax.ShapeDtypeStruct((conc_p, 1), jnp.float32),
        grid_spec=pltpu.PrefetchScalarGridSpec(
            num_scalar_prefetch=0,
            grid=grid,
            in_specs=[pl.BlockSpec((conc_p, tn), lambda n: (0, n))],
            out_specs=pl.BlockSpec((conc_p, 1), lambda n: (0, 0)),
            scratch_shapes=[pltpu.VMEM((conc_p, 1), jnp.float32)],
        ),
        compiler_params=pltpu.CompilerParams(
            dimension_semantics=("arbitrary",),      # accumulates across grid
            vmem_limit_bytes=vmem_limit,
        ),
    )(R_p)


# ---------------------------------------------------------------------------
# Path B, stage 2: build D = (W'@C + Relax*scale) * exp(mult) in bf16 column tiles.
# W' is recomputed per column tile (cheap vs the matmul) so the grid axis can
# stay "parallel" (v7x megacore shards the column tiles).
# ---------------------------------------------------------------------------
def _build_dict_call(W_p, C_bf, R_p, scale, exp_mult, tn, vmem_limit):
    conc_p, cand_p = W_p.shape
    in_p = C_bf.shape[1]
    grid = (in_p // tn,)

    def kernel(w_ref, c_ref, r_ref, s_ref, e_ref, d_ref):
        w = _project_w(w_ref[...]).astype(jnp.bfloat16)
        d = jnp.dot(w, c_ref[...], preferred_element_type=jnp.float32)
        d = d + r_ref[...] * s_ref[...]
        d_ref[...] = (d * e_ref[0]).astype(d_ref.dtype)

    return pl.pallas_call(
        kernel,
        out_shape=jax.ShapeDtypeStruct((conc_p, in_p), jnp.bfloat16),
        grid_spec=pltpu.PrefetchScalarGridSpec(
            num_scalar_prefetch=0,
            grid=grid,
            in_specs=[
                pl.BlockSpec((conc_p, cand_p), lambda n: (0, 0)),       # W (constant idx)
                pl.BlockSpec((cand_p, tn), lambda n: (0, n)),           # C column tile
                pl.BlockSpec((conc_p, tn), lambda n: (0, n)),           # Relax column tile
                pl.BlockSpec((conc_p, 1), lambda n: (0, 0)),            # row scale (constant idx)
                pl.BlockSpec(memory_space=pltpu.MemorySpace.SMEM),      # exp(multiplier)
            ],
            out_specs=pl.BlockSpec((conc_p, tn), lambda n: (0, n)),
        ),
        compiler_params=pltpu.CompilerParams(
            dimension_semantics=("parallel",),
            vmem_limit_bytes=vmem_limit,
        ),
    )(W_p, C_bf, R_p, scale, exp_mult)


# ---------------------------------------------------------------------------
# Path B, stage 3: x_hat = z @ D.  2-D grid (in_dim tiles outer, batch tiles
# inner) so the D column tile is reused across consecutive batch tiles; both
# axes are "parallel" for megacore sharding.
# ---------------------------------------------------------------------------
def _decode_call(z_bf, D_bf, bm, tn, out_dtype, vmem_limit):
    batch_p, conc_p = z_bf.shape
    in_p = D_bf.shape[1]
    grid = (in_p // tn, batch_p // bm)

    def kernel(z_ref, d_ref, out_ref):
        out_ref[...] = jnp.dot(z_ref[...], d_ref[...],
                               preferred_element_type=jnp.float32).astype(out_ref.dtype)

    return pl.pallas_call(
        kernel,
        out_shape=jax.ShapeDtypeStruct((batch_p, in_p), out_dtype),
        grid_spec=pltpu.PrefetchScalarGridSpec(
            num_scalar_prefetch=0,
            grid=grid,
            in_specs=[
                pl.BlockSpec((bm, conc_p), lambda n, i: (i, 0)),   # z batch tile (bf16)
                pl.BlockSpec((conc_p, tn), lambda n, i: (0, n)),   # D column tile (bf16)
            ],
            out_specs=pl.BlockSpec((bm, tn), lambda n, i: (i, n)),
        ),
        compiler_params=pltpu.CompilerParams(
            dimension_semantics=("parallel", "parallel"),
            vmem_limit_bytes=vmem_limit,
        ),
    )(z_bf, D_bf)


# ---------------------------------------------------------------------------
# Wrapper
# ---------------------------------------------------------------------------
def _pick_col_tile(in_dim, tn_target):
    if in_dim <= tn_target:
        tn = _round_up(in_dim, 128)
        return tn, tn
    return tn_target, _round_up(in_dim, tn_target)


def _decode_vmem_bytes(bm, tn, conc_p):
    # double-buffered bf16 z tile + bf16 D tile + f32 out tile
    return 2 * (bm * conc_p * 2 + conc_p * tn * 2 + bm * tn * 4)


def _small_vmem_bytes(batch_p, conc_p, cand_p, in_p):
    return (4 * (conc_p * cand_p + cand_p * in_p + conc_p * in_p)   # W, C(f32-equiv), Relax
            + 2 * batch_p * conc_p                                   # z bf16
            + 4 * batch_p * in_p)                                    # out f32


def ra_sae_forward(z, W, C, Relax, multiplier, *, delta=1.0, bm=256, tn=512):
    """Pallas TPU implementation of RelaxedArchetypalDictionary.forward (training path)."""
    batch, nb_concepts = z.shape
    nb_candidates, in_dim = C.shape
    assert W.shape == (nb_concepts, nb_candidates)
    assert Relax.shape == (nb_concepts, in_dim)

    vmem_cap = _vmem_capacity_bytes()
    vmem_limit = int(0.85 * vmem_cap)

    conc_p = _round_up(nb_concepts, 128)
    cand_p = _round_up(nb_candidates, 128)
    tn_eff, in_p = _pick_col_tile(in_dim, tn)

    # Lane-dense padding (zeros are inert through relu/normalize/projection/matmul).
    W_p = _pad2(jnp.asarray(W, jnp.float32), conc_p, cand_p)
    C_bf = _pad2(jnp.asarray(C, jnp.float32), cand_p, in_p).astype(jnp.bfloat16)
    R_p = _pad2(jnp.asarray(Relax, jnp.float32), conc_p, in_p)
    exp_mult = jnp.exp(jnp.asarray(multiplier, jnp.float32).reshape((1,)))

    out_dtype = z.dtype

    # Route small batches to the all-resident reassociated path only if it fits VMEM.
    small_est = 2 * _small_vmem_bytes(_round_up(batch, 16), conc_p, cand_p, in_p)
    use_small = (batch <= bm) and (small_est <= vmem_cap // 2)

    if use_small:
        batch_p = _round_up(batch, 16)   # bf16 packs 16 rows/sublane-pair
        z_bf = _pad2(z, batch_p, conc_p).astype(jnp.bfloat16)
        out = _small_call(z_bf, W_p, C_bf, R_p, exp_mult, delta, out_dtype, vmem_limit)
    else:
        # Shrink tiles if the decode-kernel working set would exceed the VMEM budget.
        budget = int(0.6 * vmem_cap)
        bm_eff = bm
        while _decode_vmem_bytes(bm_eff, tn_eff, conc_p) > budget and bm_eff > 128:
            bm_eff //= 2
        while (_decode_vmem_bytes(bm_eff, tn_eff, conc_p) > budget and tn_eff > 128
               and (tn_eff // 2) % 128 == 0 and in_p % (tn_eff // 2) == 0):
            tn_eff //= 2

        batch_p = _round_up(batch, bm_eff)
        z_bf = _pad2(z, batch_p, conc_p).astype(jnp.bfloat16)

        scale = _relax_scale_call(R_p, delta, tn_eff, vmem_limit)
        D_bf = _build_dict_call(W_p, C_bf, R_p, scale, exp_mult, tn_eff, vmem_limit)
        out = _decode_call(z_bf, D_bf, bm_eff, tn_eff, out_dtype, vmem_limit)

    return out[:batch, :in_dim]


def ra_sae_reference(z, W, C, Relax, multiplier, *, delta=1.0):
    """Pure-JAX f32 reference mirroring the PyTorch training-mode forward."""
    w = jnp.maximum(W, 0.0)
    w = w / (jnp.sum(w, axis=-1, keepdims=True) + 1e-8)
    norm = jnp.linalg.norm(Relax, axis=-1, keepdims=True)
    relax = Relax * jnp.minimum(delta / norm, 1.0)
    D = (w @ C + relax) * jnp.exp(jnp.asarray(multiplier).reshape(-1)[0])
    return z @ D


if __name__ == "__main__":
    key = jax.random.PRNGKey(0)
    k_z, k_c, k_w, k_r, k_z2, k_c2, k_w2, k_r2 = jax.random.split(key, 8)

    multiplier = jnp.array([0.25], dtype=jnp.float32)

    # ---- small config (module-like toy shapes) -> reassociated single-block path
    in_dimensions, nb_concepts, nb_candidates, batch = 32, 64, 48, 8
    z = jax.random.normal(k_z, (batch, nb_concepts), dtype=jnp.float32)
    C = jax.random.normal(k_c, (nb_candidates, in_dimensions), dtype=jnp.float32)
    W = jax.random.normal(k_w, (nb_concepts, nb_candidates), dtype=jnp.float32)
    Relax = 0.5 * jax.random.normal(k_r, (nb_concepts, in_dimensions), dtype=jnp.float32)

    out = jax.block_until_ready(ra_sae_forward(z, W, C, Relax, multiplier, delta=1.0))
    ref = ra_sae_reference(z, W, C, Relax, multiplier, delta=1.0)
    # bf16 MXU operands + approx EUP reciprocal/rsqrt -> looser-than-f32 tolerance.
    np.testing.assert_allclose(np.asarray(out), np.asarray(ref), rtol=5e-2, atol=6e-2)

    # ---- larger config -> three-stage tiled path (scale / D-build / decode),
    # exercising multiple batch tiles and multiple in_dim column tiles.
    in2, conc2, cand2, batch2 = 640, 256, 160, 320
    z2 = jax.random.normal(k_z2, (batch2, conc2), dtype=jnp.float32)
    C2 = jax.random.normal(k_c2, (cand2, in2), dtype=jnp.float32)
    W2 = jax.random.normal(k_w2, (conc2, cand2), dtype=jnp.float32)
    R2 = 0.2 * jax.random.normal(k_r2, (conc2, in2), dtype=jnp.float32)

    out2 = jax.block_until_ready(
        ra_sae_forward(z2, W2, C2, R2, multiplier, delta=0.5, bm=128, tn=512))
    ref2 = ra_sae_reference(z2, W2, C2, R2, multiplier, delta=0.5)
    np.testing.assert_allclose(np.asarray(out2), np.asarray(ref2), rtol=5e-2, atol=8e-2)

    print("KERNEL_OK")
</pallas_src>

<mosaic_0001>
module attributes {stable_mosaic.version = 11 : i64} {
  func.func @kernel(%arg0: memref<16x128xbf16, #tpu.memory_space<vmem>>, %arg1: memref<128x128xf32, #tpu.memory_space<vmem>>, %arg2: memref<128x128xbf16, #tpu.memory_space<vmem>>, %arg3: memref<128x128xf32, #tpu.memory_space<vmem>>, %arg4: memref<1xf32, #tpu.memory_space<smem>>, %arg5: memref<16x128xf32, #tpu.memory_space<vmem>>) attributes {dimension_semantics = [], scalar_prefetch = 0 : i64, scratch_operands = 0 : i64, tpu.core_type = #tpu.core_type<tc>} {
    %c0 = arith.constant 0 : index
    %c0_0 = arith.constant 0 : index
    %0 = vector.load %arg1[%c0, %c0_0] : memref<128x128xf32, #tpu.memory_space<vmem>>, vector<128x128xf32>
    %cst = arith.constant 0.000000e+00 : f32
    %1 = vector.broadcast %cst : f32 to vector<128x128xf32>
    %2 = arith.maximumf %0, %1 : vector<128x128xf32>
    %cst_1 = arith.constant dense<0.000000e+00> : vector<128xf32>
    %3 = vector.multi_reduction <add>, %2, %cst_1 [1] : vector<128x128xf32> to vector<128xf32>
    %4 = vector.shape_cast %3 : vector<128xf32> to vector<128x1xf32>
    %cst_2 = arith.constant 9.99999993E-9 : f32
    %5 = vector.broadcast %cst_2 : f32 to vector<128x1xf32>
    %6 = arith.addf %4, %5 : vector<128x1xf32>
    %7 = tpu.reciprocal %6 {approx = true} : vector<128x1xf32> -> vector<128x1xf32>
    %8 = vector.broadcast %7 : vector<128x1xf32> to vector<128x128xf32>
    %9 = arith.mulf %2, %8 : vector<128x128xf32>
    %10 = arith.truncf %9 : vector<128x128xf32> to vector<128x128xbf16>
    %c0_3 = arith.constant 0 : index
    %c0_4 = arith.constant 0 : index
    %11 = vector.load %arg3[%c0_3, %c0_4] : memref<128x128xf32, #tpu.memory_space<vmem>>, vector<128x128xf32>
    %12 = arith.mulf %11, %11 : vector<128x128xf32>
    %cst_5 = arith.constant dense<0.000000e+00> : vector<128xf32>
    %13 = vector.multi_reduction <add>, %12, %cst_5 [1] : vector<128x128xf32> to vector<128xf32>
    %14 = vector.shape_cast %13 : vector<128xf32> to vector<128x1xf32>
    %cst_6 = arith.constant 0.000000e+00 : f32
    %15 = vector.broadcast %cst_6 : f32 to vector<128x1xf32>
    %16 = arith.cmpf ogt, %14, %15 : vector<128x1xf32>
    %17 = math.rsqrt %14 : vector<128x1xf32>
    %cst_7 = arith.constant 1.000000e+00 : f32
    %18 = vector.broadcast %cst_7 : f32 to vector<128x1xf32>
    %19 = arith.mulf %18, %17 : vector<128x1xf32>
    %cst_8 = arith.constant 1.000000e+00 : f32
    %20 = vector.broadcast %cst_8 : f32 to vector<128x1xf32>
    %21 = arith.minimumf %19, %20 : vector<128x1xf32>
    %cst_9 = arith.constant 1.000000e+00 : f32
    %22 = vector.broadcast %cst_9 : f32 to vector<128x1xf32>
    %23 = arith.select %16, %21, %22 : vector<128x1xi1>, vector<128x1xf32>
    %24 = vector.broadcast %23 : vector<128x1xf32> to vector<128x128xf32>
    %25 = arith.mulf %11, %24 : vector<128x128xf32>
    %26 = arith.truncf %25 : vector<128x128xf32> to vector<128x128xbf16>
    %c0_10 = arith.constant 0 : index
    %c0_11 = arith.constant 0 : index
    %27 = vector.load %arg0[%c0_10, %c0_11] : memref<16x128xbf16, #tpu.memory_space<vmem>>, vector<16x128xbf16>
    %cst_12 = arith.constant dense<0.000000e+00> : vector<16x128xf32>
    %28 = tpu.matmul %27, %10, %cst_12 {dimension_numbers = #tpu.dot_dimension_numbers<[1], [0], [0], [1], [0, 0, 1, 1], [], []>} : vector<16x128xbf16>, vector<128x128xbf16>, vector<16x128xf32> -> vector<16x128xf32>
    %29 = arith.truncf %28 : vector<16x128xf32> to vector<16x128xbf16>
    %c0_13 = arith.constant 0 : index
    %c0_14 = arith.constant 0 : index
    %30 = vector.load %arg2[%c0_13, %c0_14] : memref<128x128xbf16, #tpu.memory_space<vmem>>, vector<128x128xbf16>
    %cst_15 = arith.constant dense<0.000000e+00> : vector<16x128xf32>
    %31 = tpu.matmul %29, %30, %cst_15 {dimension_numbers = #tpu.dot_dimension_numbers<[1], [0], [0], [1], [0, 0, 1, 1], [], []>} : vector<16x128xbf16>, vector<128x128xbf16>, vector<16x128xf32> -> vector<16x128xf32>
    %cst_16 = arith.constant dense<0.000000e+00> : vector<16x128xf32>
    %32 = tpu.matmul %27, %26, %cst_16 {dimension_numbers = #tpu.dot_dimension_numbers<[1], [0], [0], [1], [0, 0, 1, 1], [], []>} : vector<16x128xbf16>, vector<128x128xbf16>, vector<16x128xf32> -> vector<16x128xf32>
    %33 = arith.addf %31, %32 : vector<16x128xf32>
    %c0_17 = arith.constant 0 : index
    %34 = memref.load %arg4[%c0_17] : memref<1xf32, #tpu.memory_space<smem>>
    %35 = vector.broadcast %34 : f32 to vector<16x128xf32>
    %36 = arith.mulf %33, %35 : vector<16x128xf32>
    %c0_18 = arith.constant 0 : index
    %c0_19 = arith.constant 0 : index
    %37 = vector.load %arg5[%c0_18, %c0_19] : memref<16x128xf32, #tpu.memory_space<vmem>>, vector<16x128xf32>
    tpu.vector_store %arg5[%c0_18, %c0_19], %36 {strides = array<i32>} : memref<16x128xf32, #tpu.memory_space<vmem>>, vector<16x128xf32>,
    return
  }
}

</mosaic_0001>

<llo_original>
// kernel: tpu_custom_call.1
$region0: #{tpu_custom_call.1}
  #allocation0 [shape = 'u32[]', space=smem, size = 0x4, offset = 0x4, fixed_abs, tag = 'smem constant byte address 0x4 - core index']
  #allocation1 [shape = 'u32[144,128]{1,0:T(1,128)}', space=vmem, size = 0x12000, scoped, tag = 'internal scratch']
  #allocation2 [shape = 'f32[1]{0:T(128)S(6)}', space=smem, size = 0x200, scoped, tag = 'scoped memory for tpu_custom_call.1']
  %s0 = inlined_call_operand.hbm [shape: bf16[16,128], index: 0, kind: input, shape index: {}]
  %s1 = inlined_call_operand.hbm [shape: f32[128,128], index: 1, kind: input, shape index: {}]
  %s2 = inlined_call_operand.hbm [shape: bf16[128,128], index: 2, kind: input, shape index: {}]
  %s3 = inlined_call_operand.hbm [shape: f32[128,128], index: 3, kind: input, shape index: {}]
  %s4 = inlined_call_operand.<no memory space> [shape: f32[1], index: 4, kind: input, shape index: {}]
  %s5 = inlined_call_operand.hbm [shape: f32[16,128], index: 5, kind: output, shape index: {}]
  %s6 = sld [smem:[#allocation0]]
  $region46: #{tpu_custom_call.1} parent=0
    _
  %s8 = ssub.s32 1, %s6
  %s9 = scalar_select 0, %s8, %s6
  %10 = sst [smem:[#allocation2]] %s4
  $region1: #{tpu_custom_call.1} parent=0
    #allocation3 [shape = 'u8[4096]{0}', space=vmem, size = 0x1000, scoped, tag = 'input window, operand 0, single buffered']
    #allocation4 [shape = 's32[1]{0}', space=sflag, size = 0x4, scoped, tag = 'scoped memory for tpu_custom_call.1']
    #allocation5 [shape = 's32[1]{0}', space=sflag, size = 0x4, scoped, tag = 'scoped memory for tpu_custom_call.1']
    #allocation6 [shape = 'u8[65536]{0}', space=vmem, size = 0x10000, scoped, tag = 'input window, operand 1, single buffered']
    #allocation7 [shape = 's32[1]{0}', space=sflag, size = 0x4, scoped, tag = 'scoped memory for tpu_custom_call.1']
    #allocation8 [shape = 'u8[32768]{0}', space=vmem, size = 0x8000, scoped, tag = 'input window, operand 2, single buffered']
    #allocation9 [shape = 'u8[65536]{0}', space=vmem, size = 0x10000, scoped, tag = 'input window, operand 3, single buffered']
    #allocation10 [shape = 's32[1]{0}', space=sflag, size = 0x4, scoped, tag = 'scoped memory for tpu_custom_call.1']
    #allocation11 [shape = 'u8[8192]{0}', space=vmem, size = 0x2000, scoped, tag = 'output window, operand 0, single buffered']
    %11 = vsyncpa [#allocation4], 0
    %12 = vsyncpa [#allocation7], 0
    %13 = vsyncpa [#allocation10], 0
    %14 = vsyncpa [#allocation5], 0
    // Predicated region
    $region2: #{tpu_custom_call.1} parent=1 // pred_check
      _
    $region3: #{tpu_custom_call.1} parent=1 // pred_check_branch
      %16 = sbr.rel (0) target = $region5
    $region4: #{tpu_custom_call.1} parent=1 // pred_region
      %s18 = ssub.s32 128, 128
      %19 = vsyncadd [#allocation4], %s18
      %s20 = sshll.u32 [#allocation3], 4
      %s21 = int_to_ptr.vmem [resolvable:$true] %s20
      %26 = dma.hbm_to_vmem [thread:$0]  %s0, 128, %s21, [#allocation4], 64, 64, 4
    $region5: #{tpu_custom_call.1} parent=1 // pred_fallthru
      _
    // Predicated region
    $region6: #{tpu_custom_call.1} parent=1 // pred_check
      _
    $region7: #{tpu_custom_call.1} parent=1 // pred_check_branch
      %28 = sbr.rel (0) target = $region9
    $region8: #{tpu_custom_call.1} parent=1 // pred_region
      %s30 = ssub.s32 2048, 2048
      %31 = vsyncadd [#allocation7], %s30
      %s32 = sshll.u32 [#allocation6], 4
      %s33 = int_to_ptr.vmem [resolvable:$true] %s32
      %38 = dma.hbm_to_vmem [thread:$0]  %s1, 2048, %s33, [#allocation7], 128, 128, 8
    $region9: #{tpu_custom_call.1} parent=1 // pred_fallthru
      _
    // Predicated region
    $region10: #{tpu_custom_call.1} parent=1 // pred_check
      _
    $region11: #{tpu_custom_call.1} parent=1 // pred_check_branch
      %40 = sbr.rel (0) target = $region13
    $region12: #{tpu_custom_call.1} parent=1 // pred_region
      %s42 = ssub.s32 1024, 1024
      %43 = vsyncadd [#allocation7], %s42
      %s44 = sshll.u32 [#allocation8], 4
      %s45 = int_to_ptr.vmem [resolvable:$true] %s44
      %50 = dma.hbm_to_vmem [thread:$0]  %s2, 1024, %s45, [#allocation7], 64, 64, 4
    $region13: #{tpu_custom_call.1} parent=1 // pred_fallthru
      _
    // Predicated region
    $region14: #{tpu_custom_call.1} parent=1 // pred_check
      _
    $region15: #{tpu_custom_call.1} parent=1 // pred_check_branch
      %52 = sbr.rel (0) target = $region17
    $region16: #{tpu_custom_call.1} parent=1 // pred_region
      %s54 = ssub.s32 2048, 2048
      %55 = vsyncadd [#allocation10], %s54
      %s56 = sshll.u32 [#allocation9], 4
      %s57 = int_to_ptr.vmem [resolvable:$true] %s56
      %62 = dma.hbm_to_vmem [thread:$0]  %s3, 2048, %s57, [#allocation10], 128, 128, 8
    $region17: #{tpu_custom_call.1} parent=1 // pred_fallthru
      _
    // Predicated region
    $region18: #{tpu_custom_call.1} parent=1 // pred_check
      _
    $region19: #{tpu_custom_call.1} parent=1 // pred_check_branch
      %64 = sbr.rel (0) target = $region21
    $region20: #{tpu_custom_call.1} parent=1 // pred_region
      _
    $region21: #{tpu_custom_call.1} parent=1 // pred_fallthru
      _
    // Predicated region
    $region22: #{tpu_custom_call.1} parent=1 // pred_check
      _
    $region23: #{tpu_custom_call.1} parent=1 // pred_check_branch
      %66 = sbr.rel (0) target = $region25
    $region24: #{tpu_custom_call.1} parent=1 // pred_region
      %67 = dma.done [#allocation4], 128
    $region25: #{tpu_custom_call.1} parent=1 // pred_fallthru
      _
    // Predicated region
    $region26: #{tpu_custom_call.1} parent=1 // pred_check
      _
    $region27: #{tpu_custom_call.1} parent=1 // pred_check_branch
      %69 = sbr.rel (0) target = $region29
    $region28: #{tpu_custom_call.1} parent=1 // pred_region
      %70 = dma.done [#allocation7], 2048
    $region29: #{tpu_custom_call.1} parent=1 // pred_fallthru
      _
    // Predicated region
    $region30: #{tpu_custom_call.1} parent=1 // pred_check
      _
    $region31: #{tpu_custom_call.1} parent=1 // pred_check_branch
      %72 = sbr.rel (0) target = $region33
    $region32: #{tpu_custom_call.1} parent=1 // pred_region
      %73 = dma.done [#allocation7], 1024
    $region33: #{tpu_custom_call.1} parent=1 // pred_fallthru
      _
    // Predicated region
    $region34: #{tpu_custom_call.1} parent=1 // pred_check
      _
    $region35: #{tpu_custom_call.1} parent=1 // pred_check_branch
      %75 = sbr.rel (0) target = $region37
    $region36: #{tpu_custom_call.1} parent=1 // pred_region
      %76 = dma.done [#allocation10], 2048
    $region37: #{tpu_custom_call.1} parent=1 // pred_fallthru
      _
    %v78 = vld [vmem:[#allocation6] sm:$0xff]
    %v79 = vld [vmem:[#allocation6 + $0x8] sm:$0xff]
    %v80 = vld [vmem:[#allocation6 + $0x10] sm:$0xff]
    %v81 = vld [vmem:[#allocation6 + $0x18] sm:$0xff]
    %v82 = vld [vmem:[#allocation6 + $0x20] sm:$0xff]
    %v83 = vld [vmem:[#allocation6 + $0x28] sm:$0xff]
    %v84 = vld [vmem:[#allocation6 + $0x30] sm:$0xff]
    %v85 = vld [vmem:[#allocation6 + $0x38] sm:$0xff]
    %v86 = vld [vmem:[#allocation6 + $0x40] sm:$0xff]
    %v87 = vld [vmem:[#allocation6 + $0x48] sm:$0xff]
    %v88 = vld [vmem:[#allocation6 + $0x50] sm:$0xff]
    %v89 = vld [vmem:[#allocation6 + $0x58] sm:$0xff]
    %v90 = vld [vmem:[#allocation6 + $0x60] sm:$0xff]
    %v91 = vld [vmem:[#allocation6 + $0x68] sm:$0xff]
    %v92 = vld [vmem:[#allocation6 + $0x70] sm:$0xff]
    %v93 = vld [vmem:[#allocation6 + $0x78] sm:$0xff]
    %v94 = vmax.f32 %v78, 0.0
    %v95 = vmax.f32 %v79, 0.0
    %v96 = vmax.f32 %v80, 0.0
    %v97 = vmax.f32 %v81, 0.0
    %v98 = vmax.f32 %v82, 0.0
    %v99 = vmax.f32 %v83, 0.0
    %v100 = vmax.f32 %v84, 0.0
    %v101 = vmax.f32 %v85, 0.0
    %v102 = vmax.f32 %v86, 0.0
    %v103 = vmax.f32 %v87, 0.0
    %v104 = vmax.f32 %v88, 0.0
    %v105 = vmax.f32 %v89, 0.0
    %v106 = vmax.f32 %v90, 0.0
    %v107 = vmax.f32 %v91, 0.0
    %v108 = vmax.f32 %v92, 0.0
    %v109 = vmax.f32 %v93, 0.0
    %110 = vadd.xlane.f32.xlu0 %v94
    %v111 = vpop.xlane.xlu0 %110
    %112 = vadd.xlane.f32.xlu0 %v95
    %v113 = vpop.xlane.xlu0 %112
    %114 = vadd.xlane.f32.xlu0 %v96
    %v115 = vpop.xlane.xlu0 %114
    %116 = vadd.xlane.f32.xlu0 %v97
    %v117 = vpop.xlane.xlu0 %116
    %118 = vadd.xlane.f32.xlu0 %v98
    %v119 = vpop.xlane.xlu0 %118
    %120 = vadd.xlane.f32.xlu0 %v99
    %v121 = vpop.xlane.xlu0 %120
    %122 = vadd.xlane.f32.xlu0 %v100
    %v123 = vpop.xlane.xlu0 %122
    %124 = vadd.xlane.f32.xlu0 %v101
    %v125 = vpop.xlane.xlu0 %124
    %126 = vadd.xlane.f32.xlu0 %v102
    %v127 = vpop.xlane.xlu0 %126
    %128 = vadd.xlane.f32.xlu0 %v103
    %v129 = vpop.xlane.xlu0 %128
    %130 = vadd.xlane.f32.xlu0 %v104
    %v131 = vpop.xlane.xlu0 %130
    %132 = vadd.xlane.f32.xlu0 %v105
    %v133 = vpop.xlane.xlu0 %132
    %134 = vadd.xlane.f32.xlu0 %v106
    %v135 = vpop.xlane.xlu0 %134
    %136 = vadd.xlane.f32.xlu0 %v107
    %v137 = vpop.xlane.xlu0 %136
    %138 = vadd.xlane.f32.xlu0 %v108
    %v139 = vpop.xlane.xlu0 %138
    %140 = vadd.xlane.f32.xlu0 %v109
    %v141 = vpop.xlane.xlu0 %140
    %v142 = vadd.f32 %v111, 1e-08
    %v143 = vadd.f32 %v113, 1e-08
    %v144 = vadd.f32 %v115, 1e-08
    %v145 = vadd.f32 %v117, 1e-08
    %v146 = vadd.f32 %v119, 1e-08
    %v147 = vadd.f32 %v121, 1e-08
    %v148 = vadd.f32 %v123, 1e-08
    %v149 = vadd.f32 %v125, 1e-08
    %v150 = vadd.f32 %v127, 1e-08
    %v151 = vadd.f32 %v129, 1e-08
    %v152 = vadd.f32 %v131, 1e-08
    %v153 = vadd.f32 %v133, 1e-08
    %v154 = vadd.f32 %v135, 1e-08
    %v155 = vadd.f32 %v137, 1e-08
    %v156 = vadd.f32 %v139, 1e-08
    %v157 = vadd.f32 %v141, 1e-08
    %v158 = vrcp.pop %v142
    %v159 = vrcp.pop %v143
    %v160 = vrcp.pop %v144
    %v161 = vrcp.pop %v145
    %v162 = vrcp.pop %v146
    %v163 = vrcp.pop %v147
    %v164 = vrcp.pop %v148
    %v165 = vrcp.pop %v149
    %v166 = vrcp.pop %v150
    %v167 = vrcp.pop %v151
    %v168 = vrcp.pop %v152
    %v169 = vrcp.pop %v153
    %v170 = vrcp.pop %v154
    %v171 = vrcp.pop %v155
    %v172 = vrcp.pop %v156
    %v173 = vrcp.pop %v157
    %v174 = vmul.f32 %v94, %v158
    %v175 = vmul.f32 %v95, %v159
    %v176 = vmul.f32 %v96, %v160
    %v177 = vmul.f32 %v97, %v161
    %v178 = vmul.f32 %v98, %v162
    %v179 = vmul.f32 %v99, %v163
    %v180 = vmul.f32 %v100, %v164
    %v181 = vmul.f32 %v101, %v165
    %v182 = vmul.f32 %v102, %v166
    %v183 = vmul.f32 %v103, %v167
    %v184 = vmul.f32 %v104, %v168
    %v185 = vmul.f32 %v105, %v169
    %v186 = vmul.f32 %v106, %v170
    %v187 = vmul.f32 %v107, %v171
    %v188 = vmul.f32 %v108, %v172
    %v189 = vmul.f32 %v109, %v173
    %v190 = vpack.c.bf16 %v175, %v174
    %v191 = vpack.c.bf16 %v177, %v176
    %v192 = vpack.c.bf16 %v179, %v178
    %v193 = vpack.c.bf16 %v181, %v180
    %v194 = vpack.c.bf16 %v183, %v182
    %v195 = vpack.c.bf16 %v185, %v184
    %v196 = vpack.c.bf16 %v187, %v186
    %v197 = vpack.c.bf16 %v189, %v188
    %v198 = vld [vmem:[#allocation9] sm:$0xff]
    %v199 = vld [vmem:[#allocation9 + $0x8] sm:$0xff]
    %v200 = vld [vmem:[#allocation9 + $0x10] sm:$0xff]
    %v201 = vld [vmem:[#allocation9 + $0x18] sm:$0xff]
    %v202 = vld [vmem:[#allocation9 + $0x20] sm:$0xff]
    %v203 = vld [vmem:[#allocation9 + $0x28] sm:$0xff]
    %v204 = vld [vmem:[#allocation9 + $0x30] sm:$0xff]
    %v205 = vld [vmem:[#allocation9 + $0x38] sm:$0xff]
    %v206 = vld [vmem:[#allocation9 + $0x40] sm:$0xff]
    %v207 = vld [vmem:[#allocation9 + $0x48] sm:$0xff]
    %v208 = vld [vmem:[#allocation9 + $0x50] sm:$0xff]
    %v209 = vld [vmem:[#allocation9 + $0x58] sm:$0xff]
    %v210 = vld [vmem:[#allocation9 + $0x60] sm:$0xff]
    %v211 = vld [vmem:[#allocation9 + $0x68] sm:$0xff]
    %v212 = vld [vmem:[#allocation9 + $0x70] sm:$0xff]
    %v213 = vld [vmem:[#allocation9 + $0x78] sm:$0xff]
    %v214 = vmul.f32 %v198, %v198
    %v215 = vmul.f32 %v199, %v199
    %v216 = vmul.f32 %v200, %v200
    %v217 = vmul.f32 %v201, %v201
    %v218 = vmul.f32 %v202, %v202
    %v219 = vmul.f32 %v203, %v203
    %v220 = vmul.f32 %v204, %v204
    %v221 = vmul.f32 %v205, %v205
    %v222 = vmul.f32 %v206, %v206
    %v223 = vmul.f32 %v207, %v207
    %v224 = vmul.f32 %v208, %v208
    %v225 = vmul.f32 %v209, %v209
    %v226 = vmul.f32 %v210, %v210
    %v227 = vmul.f32 %v211, %v211
    %v228 = vmul.f32 %v212, %v212
    %v229 = vmul.f32 %v213, %v213
    %230 = vadd.xlane.f32.xlu0 %v214
    %v231 = vpop.xlane.xlu0 %230
    %232 = vadd.xlane.f32.xlu0 %v215
    %v233 = vpop.xlane.xlu0 %232
    %234 = vadd.xlane.f32.xlu0 %v216
    %v235 = vpop.xlane.xlu0 %234
    %236 = vadd.xlane.f32.xlu0 %v217
    %v237 = vpop.xlane.xlu0 %236
    %238 = vadd.xlane.f32.xlu0 %v218
    %v239 = vpop.xlane.xlu0 %238
    %240 = vadd.xlane.f32.xlu0 %v219
    %v241 = vpop.xlane.xlu0 %240
    %242 = vadd.xlane.f32.xlu0 %v220
    %v243 = vpop.xlane.xlu0 %242
    %244 = vadd.xlane.f32.xlu0 %v221
    %v245 = vpop.xlane.xlu0 %244
    %246 = vadd.xlane.f32.xlu0 %v222
    %v247 = vpop.xlane.xlu0 %246
    %248 = vadd.xlane.f32.xlu0 %v223
    %v249 = vpop.xlane.xlu0 %248
    %250 = vadd.xlane.f32.xlu0 %v224
    %v251 = vpop.xlane.xlu0 %250
    %252 = vadd.xlane.f32.xlu0 %v225
    %v253 = vpop.xlane.xlu0 %252
    %254 = vadd.xlane.f32.xlu0 %v226
    %v255 = vpop.xlane.xlu0 %254
    %256 = vadd.xlane.f32.xlu0 %v227
    %v257 = vpop.xlane.xlu0 %256
    %258 = vadd.xlane.f32.xlu0 %v228
    %v259 = vpop.xlane.xlu0 %258
    %260 = vadd.xlane.f32.xlu0 %v229
    %v261 = vpop.xlane.xlu0 %260
    %vm262 = vcmp.gt.f32.partialorder %v231, 0.0
    %vm263 = vcmp.gt.f32.partialorder %v233, 0.0
    %vm264 = vcmp.gt.f32.partialorder %v235, 0.0
    %vm265 = vcmp.gt.f32.partialorder %v237, 0.0
    %vm266 = vcmp.gt.f32.partialorder %v239, 0.0
    %vm267 = vcmp.gt.f32.partialorder %v241, 0.0
    %vm268 = vcmp.gt.f32.partialorder %v243, 0.0
    %vm269 = vcmp.gt.f32.partialorder %v245, 0.0
    %vm270 = vcmp.gt.f32.partialorder %v247, 0.0
    %vm271 = vcmp.gt.f32.partialorder %v249, 0.0
    %vm272 = vcmp.gt.f32.partialorder %v251, 0.0
    %vm273 = vcmp.gt.f32.partialorder %v253, 0.0
    %vm274 = vcmp.gt.f32.partialorder %v255, 0.0
    %vm275 = vcmp.gt.f32.partialorder %v257, 0.0
    %vm276 = vcmp.gt.f32.partialorder %v259, 0.0
    %vm277 = vcmp.gt.f32.partialorder %v261, 0.0
    %v278 = vrsqrt.pop %v231
    %v279 = vrsqrt.pop %v233
    %v280 = vrsqrt.pop %v235
    %v281 = vrsqrt.pop %v237
    %v282 = vrsqrt.pop %v239
    %v283 = vrsqrt.pop %v241
    %v284 = vrsqrt.pop %v243
    %v285 = vrsqrt.pop %v245
    %v286 = vrsqrt.pop %v247
    %v287 = vrsqrt.pop %v249
    %v288 = vrsqrt.pop %v251
    %v289 = vrsqrt.pop %v253
    %v290 = vrsqrt.pop %v255
    %v291 = vrsqrt.pop %v257
    %v292 = vrsqrt.pop %v259
    %v293 = vrsqrt.pop %v261
    %v294 = vmin.f32 %v278, 1.0
    %v295 = vmin.f32 %v279, 1.0
    %v296 = vmin.f32 %v280, 1.0
    %v297 = vmin.f32 %v281, 1.0
    %v298 = vmin.f32 %v282, 1.0
    %v299 = vmin.f32 %v283, 1.0
    %v300 = vmin.f32 %v284, 1.0
    %v301 = vmin.f32 %v285, 1.0
    %v302 = vmin.f32 %v286, 1.0
    %v303 = vmin.f32 %v287, 1.0
    %v304 = vmin.f32 %v288, 1.0
    %v305 = vmin.f32 %v289, 1.0
    %v306 = vmin.f32 %v290, 1.0
    %v307 = vmin.f32 %v291, 1.0
    %v308 = vmin.f32 %v292, 1.0
    %v309 = vmin.f32 %v293, 1.0
    %v310 = vsel %vm262, %v294, 1.0
    %v311 = vsel %vm263, %v295, 1.0
    %v312 = vsel %vm264, %v296, 1.0
    %v313 = vsel %vm265, %v297, 1.0
    %v314 = vsel %vm266, %v298, 1.0
    %v315 = vsel %vm267, %v299, 1.0
    %v316 = vsel %vm268, %v300, 1.0
    %v317 = vsel %vm269, %v301, 1.0
    %v318 = vsel %vm270, %v302, 1.0
    %v319 = vsel %vm271, %v303, 1.0
    %v320 = vsel %vm272, %v304, 1.0
    %v321 = vsel %vm273, %v305, 1.0
    %v322 = vsel %vm274, %v306, 1.0
    %v323 = vsel %vm275, %v307, 1.0
    %v324 = vsel %vm276, %v308, 1.0
    %v325 = vsel %vm277, %v309, 1.0
    %v326 = vmul.f32 %v198, %v310
    %v327 = vmul.f32 %v199, %v311
    %v328 = vmul.f32 %v200, %v312
    %v329 = vmul.f32 %v201, %v313
    %v330 = vmul.f32 %v202, %v314
    %v331 = vmul.f32 %v203, %v315
    %v332 = vmul.f32 %v204, %v316
    %v333 = vmul.f32 %v205, %v317
    %v334 = vmul.f32 %v206, %v318
    %v335 = vmul.f32 %v207, %v319
    %v336 = vmul.f32 %v208, %v320
    %v337 = vmul.f32 %v209, %v321
    %v338 = vmul.f32 %v210, %v322
    %v339 = vmul.f32 %v211, %v323
    %v340 = vmul.f32 %v212, %v324
    %v341 = vmul.f32 %v213, %v325
    %v342 = vpack.c.bf16 %v327, %v326
    %v343 = vpack.c.bf16 %v329, %v328
    %v344 = vpack.c.bf16 %v331, %v330
    %v345 = vpack.c.bf16 %v333, %v332
    %v346 = vpack.c.bf16 %v335, %v334
    %v347 = vpack.c.bf16 %v337, %v336
    %v348 = vpack.c.bf16 %v339, %v338
    %v349 = vpack.c.bf16 %v341, %v340
    %v350 = vld [vmem:[#allocation3] sm:$0xf]
    %v351 = vld [vmem:[#allocation3 + $0x4] sm:$0xf]
    %v354 = vunpack.c.l.b16 %v350
    %v355 = vunpack.c.l.b16 %v351
    %v356 = vpack.c.b16 %v355, %v354
    %358 = vmatprep.subr.bf16.mxu0 0
    %359 = vmatpush1.bf16.msra.mxu0 %v190
    %360 = vmatprep.subr.bf16.mxu0 0
    %361 = vmatpush1.bf16.msra.mxu0 %v191
    %362 = vmatprep.subr.bf16.mxu0 0
    %363 = vmatpush1.bf16.msra.mxu0 %v192
    %364 = vmatprep.subr.bf16.mxu0 0
    %365 = vmatpush1.bf16.msra.mxu0 %v193
    %366 = vmatprep.subr.bf16.mxu0 0
    %367 = vmatpush1.bf16.msra.mxu0 %v194
    %368 = vmatprep.subr.bf16.mxu0 0
    %369 = vmatpush1.bf16.msra.mxu0 %v195
    %370 = vmatprep.subr.bf16.mxu0 0
    %371 = vmatpush1.bf16.msra.mxu0 %v196
    %372 = vmatprep.subr.bf16.mxu0 0
    %373 = vmatpush1.bf16.msra.mxu0 %v197
    %374 = vmatprep.subr.bf16.mxu0 0
    %375 = vmatpush1.bf16.msra.mxu0 0
    %376 = vmatprep.subr.bf16.mxu0 0
    %377 = vmatpush1.bf16.msra.mxu0 0
    %378 = vmatprep.subr.bf16.mxu0 0
    %379 = vmatpush1.bf16.msra.mxu0 0
    %380 = vmatprep.subr.bf16.mxu0 0
    %381 = vmatpush1.bf16.msra.mxu0 0
    %382 = vmatprep.subr.bf16.mxu0 0
    %383 = vmatpush1.bf16.msra.mxu0 0
    %384 = vmatprep.subr.bf16.mxu0 0
    %385 = vmatpush1.bf16.msra.mxu0 0
    %386 = vmatprep.subr.bf16.mxu0 0
    %387 = vmatpush1.bf16.msra.mxu0 0
    %388 = vmatprep.subr.bf16.mxu0 0
    %389 = vmatpush1.bf16.msra.mxu0 0
    %390 = vmatprep.mubr.bf16.mxu0 0
    %391 = vmatmul.mubr.bf16.gmra.mrb[0].mxu0 %v356
    %v392 = vpop.f32.mrb[0].mxu0
    %v393 = vadd.f32 0.0, %v392
    %v394 = vpop.f32.mrb[0].mxu0
    %v395 = vpop.f32.mrb[0].mxu0
    %v396 = vadd.f32 0.0, %v395
    %v397 = vpop.f32.mrb[0].mxu0
    %398 = vdwg.mxu0
    %v399 = vpack.c.bf16 %v396, %v393
    %v400 = vld [vmem:[#allocation8] sm:$0xf]
    %v401 = vld [vmem:[#allocation8 + $0x4] sm:$0xf]
    %v402 = vld [vmem:[#allocation8 + $0x8] sm:$0xf]
    %v403 = vld [vmem:[#allocation8 + $0xc] sm:$0xf]
    %v404 = vld [vmem:[#allocation8 + $0x10] sm:$0xf]
    %v405 = vld [vmem:[#allocation8 + $0x14] sm:$0xf]
    %v406 = vld [vmem:[#allocation8 + $0x18] sm:$0xf]
    %v407 = vld [vmem:[#allocation8 + $0x1c] sm:$0xf]
    %v408 = vld [vmem:[#allocation8 + $0x20] sm:$0xf]
    %v409 = vld [vmem:[#allocation8 + $0x24] sm:$0xf]
    %v410 = vld [vmem:[#allocation8 + $0x28] sm:$0xf]
    %v411 = vld [vmem:[#allocation8 + $0x2c] sm:$0xf]
    %v412 = vld [vmem:[#allocation8 + $0x30] sm:$0xf]
    %v413 = vld [vmem:[#allocation8 + $0x34] sm:$0xf]
    %v414 = vld [vmem:[#allocation8 + $0x38] sm:$0xf]
    %v415 = vld [vmem:[#allocation8 + $0x3c] sm:$0xf]
    %416 = vmatprep.subr.bf16.mxu0 0
    %417 = vmatpush1.bf16.msra.mxu0 %v342
    %418 = vmatprep.subr.bf16.mxu0 0
    %419 = vmatpush1.bf16.msra.mxu0 %v343
    %420 = vmatprep.subr.bf16.mxu0 0
    %421 = vmatpush1.bf16.msra.mxu0 %v344
    %422 = vmatprep.subr.bf16.mxu0 0
    %423 = vmatpush1.bf16.msra.mxu0 %v345
    %424 = vmatprep.subr.bf16.mxu0 0
    %425 = vmatpush1.bf16.msra.mxu0 %v346
    %426 = vmatprep.subr.bf16.mxu0 0
    %427 = vmatpush1.bf16.msra.mxu0 %v347
    %428 = vmatprep.subr.bf16.mxu0 0
    %429 = vmatpush1.bf16.msra.mxu0 %v348
    %430 = vmatprep.subr.bf16.mxu0 0
    %431 = vmatpush1.bf16.msra.mxu0 %v349
    %432 = vmatprep.subr.bf16.mxu0 0
    %433 = vmatpush1.bf16.msra.mxu0 0
    %434 = vmatprep.subr.bf16.mxu0 0
    %435 = vmatpush1.bf16.msra.mxu0 0
    %436 = vmatprep.subr.bf16.mxu0 0
    %437 = vmatpush1.bf16.msra.mxu0 0
    %438 = vmatprep.subr.bf16.mxu0 0
    %439 = vmatpush1.bf16.msra.mxu0 0
    %440 = vmatprep.subr.bf16.mxu0 0
    %441 = vmatpush1.bf16.msra.mxu0 0
    %442 = vmatprep.subr.bf16.mxu0 0
    %443 = vmatpush1.bf16.msra.mxu0 0
    %444 = vmatprep.subr.bf16.mxu0 0
    %445 = vmatpush1.bf16.msra.mxu0 0
    %446 = vmatprep.subr.bf16.mxu0 0
    %447 = vmatpush1.bf16.msra.mxu0 0
    %448 = vmatprep.mubr.bf16.mxu0 0
    %449 = vmatmul.mubr.bf16.gmra.mrb[0].mxu0 %v356
    %v450 = vpop.f32.mrb[0].mxu0
    %v451 = vadd.f32 0.0, %v450
    %v452 = vpop.f32.mrb[0].mxu0
    %v453 = vpop.f32.mrb[0].mxu0
    %v454 = vadd.f32 0.0, %v453
    %v455 = vpop.f32.mrb[0].mxu0
    %456 = vdwg.mxu0
    %v473 = vunpack.c.l.b16 %v400
    %v474 = vunpack.c.l.b16 %v401
    %v475 = vunpack.c.l.b16 %v402
    %v476 = vunpack.c.l.b16 %v403
    %v477 = vunpack.c.l.b16 %v404
    %v478 = vunpack.c.l.b16 %v405
    %v479 = vunpack.c.l.b16 %v406
    %v480 = vunpack.c.l.b16 %v407
    %v481 = vunpack.c.l.b16 %v408
    %v482 = vunpack.c.l.b16 %v409
    %v483 = vunpack.c.l.b16 %v410
    %v484 = vunpack.c.l.b16 %v411
    %v485 = vunpack.c.l.b16 %v412
    %v486 = vunpack.c.l.b16 %v413
    %v487 = vunpack.c.l.b16 %v414
    %v488 = vunpack.c.l.b16 %v415
    %v489 = vpack.c.b16 %v474, %v473
    %v490 = vpack.c.b16 %v476, %v475
    %v491 = vpack.c.b16 %v478, %v477
    %v492 = vpack.c.b16 %v480, %v479
    %v493 = vpack.c.b16 %v482, %v481
    %v494 = vpack.c.b16 %v484, %v483
    %v495 = vpack.c.b16 %v486, %v485
    %v496 = vpack.c.b16 %v488, %v487
    %505 = vmatprep.subr.bf16.mxu0 0
    %506 = vmatpush1.bf16.msra.mxu0 %v489
    %507 = vmatprep.subr.bf16.mxu0 0
    %508 = vmatpush1.bf16.msra.mxu0 %v490
    %509 = vmatprep.subr.bf16.mxu0 0
    %510 = vmatpush1.bf16.msra.mxu0 %v491
    %511 = vmatprep.subr.bf16.mxu0 0
    %512 = vmatpush1.bf16.msra.mxu0 %v492
    %513 = vmatprep.subr.bf16.mxu0 0
    %514 = vmatpush1.bf16.msra.mxu0 %v493
    %515 = vmatprep.subr.bf16.mxu0 0
    %516 = vmatpush1.bf16.msra.mxu0 %v494
    %517 = vmatprep.subr.bf16.mxu0 0
    %518 = vmatpush1.bf16.msra.mxu0 %v495
    %519 = vmatprep.subr.bf16.mxu0 0
    %520 = vmatpush1.bf16.msra.mxu0 %v496
    %521 = vmatprep.subr.bf16.mxu0 0
    %522 = vmatpush1.bf16.msra.mxu0 0
    %523 = vmatprep.subr.bf16.mxu0 0
    %524 = vmatpush1.bf16.msra.mxu0 0
    %525 = vmatprep.subr.bf16.mxu0 0
    %526 = vmatpush1.bf16.msra.mxu0 0
    %527 = vmatprep.subr.bf16.mxu0 0
    %528 = vmatpush1.bf16.msra.mxu0 0
    %529 = vmatprep.subr.bf16.mxu0 0
    %530 = vmatpush1.bf16.msra.mxu0 0
    %531 = vmatprep.subr.bf16.mxu0 0
    %532 = vmatpush1.bf16.msra.mxu0 0
    %533 = vmatprep.subr.bf16.mxu0 0
    %534 = vmatpush1.bf16.msra.mxu0 0
    %535 = vmatprep.subr.bf16.mxu0 0
    %536 = vmatpush1.bf16.msra.mxu0 0
    %537 = vmatprep.mubr.bf16.mxu0 0
    %538 = vmatmul.mubr.bf16.gmra.mrb[0].mxu0 %v399
    %v539 = vpop.f32.mrb[0].mxu0
    %v540 = vadd.f32 %v451, %v539
    %v541 = vpop.f32.mrb[0].mxu0
    %v542 = vpop.f32.mrb[0].mxu0
    %v543 = vadd.f32 %v454, %v542
    %v544 = vpop.f32.mrb[0].mxu0
    %545 = vdwg.mxu0
    %s546 = sld [smem:[#allocation2]]
    %v547 = vstv %s546
    %v548 = vmul.f32 %v540, %v547
    %v549 = vmul.f32 %v543, %v547
    %550 = vst [vmem:[#allocation11] sm:$0xff] %v548
    %551 = vst [vmem:[#allocation11 + $0x8] sm:$0xff] %v549
    // Predicated region
    $region38: #{tpu_custom_call.1} parent=1 // pred_check
      _
    $region39: #{tpu_custom_call.1} parent=1 // pred_check_branch
      %553 = sbr.rel (0) target = $region41
    $region40: #{tpu_custom_call.1} parent=1 // pred_region
      %s555 = ssub.s32 256, 256
      %556 = vsyncadd [#allocation5], %s555
      %s557 = sshll.u32 [#allocation11], 4
      %s558 = int_to_ptr.vmem [resolvable:$true] %s557
      %563 = dma.vmem_to_hbm [thread:$0]  %s558, 256, %s5, [#allocation5], 128, 128, 8
    $region41: #{tpu_custom_call.1} parent=1 // pred_fallthru
      _
    // Predicated region
    $region42: #{tpu_custom_call.1} parent=1 // pred_check
      _
    $region43: #{tpu_custom_call.1} parent=1 // pred_check_branch
      %565 = sbr.rel (0) target = $region45
    $region44: #{tpu_custom_call.1} parent=1 // pred_region
      %566 = dma.done [#allocation5], 256
    $region45: #{tpu_custom_call.1} parent=1 // pred_fallthru
      _
    %567 = vsyncpa [#allocation4], 1
    %568 = vsyncpa [#allocation7], 1
    %569 = vsyncpa [#allocation10], 1
    %570 = vsyncpa [#allocation5], 1

</llo_original>
